<compile_context>
chip_gen: v5e
topology: v5e:2x2
jax: 0.10.0
libtpu: 0.0.40
codegen_flags: <defaults>
</compile_context>

<pallas_src>
import jax
import jax.numpy as jnp
from jax.experimental import pallas as pl
from jax.experimental.pallas import tpu as pltpu


_MAX_BATCH_BLOCK = 16   # bounds per-step unrolled code size and scratch lanes


def _vmem_budget():
    """Returns (vmem_limit_bytes to request, max bytes for one x block)."""
    try:
        phys = int(pltpu.get_tpu_info().vmem_capacity_bytes)
    except Exception:
        phys = 64 << 20                      # v7x has the smallest VMEM; be safe
    # Explicit scoped-VMEM limit (defaults are only 16 MiB on v5e / 32 MiB on
    # v6e/v7x, which the old 4 MiB blocks sat right at on v5e).
    vmem_limit = phys * 3 // 4               # 96 MiB on v5e/v6e, 48 MiB on v7x
    # Auto-pipelining keeps ~2 input + 2 output buffers resident (~4x block),
    # plus weights/scratch; leave ~20% headroom.
    block_cap = (16 << 20) if phys >= (128 << 20) else (8 << 20)
    block = min(block_cap, (vmem_limit * 4 // 5) // 4)
    return vmem_limit, block


# --------------------------------------------------------------------------
# Single-pass kernel: whole (C, HW) plane(s) of bb batch elements per step.
# --------------------------------------------------------------------------
def _channel_attention_kernel(x_ref, w1_ref, b1_ref, w2_ref, b2_ref, o_ref,
                              pooled_scr):
    # x_ref/o_ref: (bb, C, HW) block, input dtype.  pooled_scr: (C, bb) f32.
    bb, ch, hw = x_ref.shape
    inv_hw = jnp.float32(1.0 / hw)
    ones_col = jnp.ones((hw, 1), dtype=x_ref.dtype)

    # (1) AdaptiveAvgPool2d(1): spatial mean of every channel row as an MXU
    #     matmul with f32 accumulation (no f32 copy of the tile).  Each column
    #     of the scratch is independent -> no serial cross-batch chain.
    for b in range(bb):
        pooled_scr[:, b:b + 1] = (
            jnp.dot(x_ref[b], ones_col, preferred_element_type=jnp.float32)
            * inv_hw)

    # (2) conv1x1 -> ReLU -> conv1x1 -> sigmoid for ALL bb elements as two
    #     batched matmuls (no per-batch FC unroll, no jnp.stack).
    pooled = pooled_scr[...]                                            # (C, bb) f32
    h = jnp.dot(w1_ref[...], pooled,
                preferred_element_type=jnp.float32) + b1_ref[...]      # (Cr, bb)
    h = jnp.maximum(h, 0.0)
    y = jnp.dot(w2_ref[...], h,
                preferred_element_type=jnp.float32) + b2_ref[...]      # (C, bb)
    gate = jax.nn.sigmoid(y).astype(o_ref.dtype)                       # (C, bb)

    # (3) out = x * y: each per-batch multiply is a full lane-dense (C, HW)
    #     VPU op with its gate column broadcast along lanes.  Padded tail
    #     batch rows (cdiv packing) are computed but never written back.
    for b in range(bb):
        o_ref[b] = x_ref[b] * gate[:, b:b + 1]


def _single_pass(x, w1m, b1c, w2m, b2c, block_budget, vmem_limit, donate_x):
    B, C, HW = x.shape
    Cr = w1m.shape[0]
    elem_bytes = C * HW * x.dtype.itemsize

    bb = max(1, min(block_budget // elem_bytes, B, _MAX_BATCH_BLOCK))
    if B >= 2:
        # Prefer >=2 grid steps: shards the batch axis across v7x's two
        # TensorCores and gives the pipeline something to overlap.
        bb = min(bb, pl.cdiv(B, 2))
    grid = (pl.cdiv(B, bb),)

    return pl.pallas_call(
        _channel_attention_kernel,
        out_shape=jax.ShapeDtypeStruct((B, C, HW), x.dtype),
        grid_spec=pltpu.PrefetchScalarGridSpec(
            num_scalar_prefetch=0,
            grid=grid,
            in_specs=[
                pl.BlockSpec((bb, C, HW), lambda i: (i, 0, 0)),
                pl.BlockSpec((Cr, C), lambda i: (0, 0)),
                pl.BlockSpec((Cr, 1), lambda i: (0, 0)),
                pl.BlockSpec((C, Cr), lambda i: (0, 0)),
                pl.BlockSpec((C, 1), lambda i: (0, 0)),
            ],
            out_specs=pl.BlockSpec((bb, C, HW), lambda i: (i, 0, 0)),
            scratch_shapes=[pltpu.VMEM((C, bb), jnp.float32)],
        ),
        compiler_params=pltpu.CompilerParams(
            dimension_semantics=("parallel",),
            vmem_limit_bytes=vmem_limit,
        ),
        input_output_aliases={0: 0} if donate_x else {},
    )(x, w1m, b1c, w2m, b2c)


# --------------------------------------------------------------------------
# Two-pass HW-tiled fallback: one batch element does not fit the block budget.
# --------------------------------------------------------------------------
def _two_pass(x, w1m, b1c, w2m, b2c, block_budget, vmem_limit, donate_x):
    B, C, HW = x.shape
    itemsize = x.dtype.itemsize

    if HW <= 128:
        hw_t = HW
    else:
        hw_t = max(128, (block_budget // (C * itemsize)) // 128 * 128)
        hw_t = min(hw_t, (HW // 128) * 128)
    n_hw = pl.cdiv(HW, hw_t)

    # Pass 1: per-(batch, channel) spatial sums, accumulated over HW tiles.
    def pool_kernel(x_ref, sum_ref):
        j = pl.program_id(1)

        @pl.when(j == 0)
        def _():
            sum_ref[...] = jnp.zeros_like(sum_ref)

        xt = x_ref[0]                                        # (C, hw_t)
        if HW % hw_t != 0:
            lane = jax.lax.broadcasted_iota(jnp.int32, xt.shape, 1)
            xt = jnp.where(lane + j * hw_t < HW, xt, jnp.zeros_like(xt))
        ones_col = jnp.ones((hw_t, 1), dtype=xt.dtype)
        sum_ref[0] += jnp.dot(xt, ones_col, preferred_element_type=jnp.float32)

    sums = pl.pallas_call(
        pool_kernel,
        out_shape=jax.ShapeDtypeStruct((B, C, 1), jnp.float32),
        grid_spec=pltpu.PrefetchScalarGridSpec(
            num_scalar_prefetch=0,
            grid=(B, n_hw),
            in_specs=[pl.BlockSpec((1, C, hw_t), lambda b, j: (b, 0, j))],
            out_specs=pl.BlockSpec((1, C, 1), lambda b, j: (b, 0, 0)),
        ),
        compiler_params=pltpu.CompilerParams(
            dimension_semantics=("parallel", "arbitrary"),
            vmem_limit_bytes=vmem_limit,
        ),
    )(x)

    # Gate MLP on (B, C) values: microscopic, done as plain XLA glue between
    # the two passes (not worth a kernel).
    mean = sums[:, :, 0] * (1.0 / HW)                         # (B, C) f32
    h = jnp.maximum(mean @ w1m.T + b1c[:, 0], 0.0)            # (B, Cr)
    gate = jax.nn.sigmoid(h @ w2m.T + b2c[:, 0])              # (B, C)
    gate = gate.astype(x.dtype)[:, :, None]                   # (B, C, 1)

    # Pass 2: out = x * gate, streamed over lane-aligned HW tiles.
    def apply_kernel(x_ref, g_ref, o_ref):
        o_ref[...] = x_ref[...] * g_ref[...]

    return pl.pallas_call(
        apply_kernel,
        out_shape=jax.ShapeDtypeStruct((B, C, HW), x.dtype),
        grid_spec=pltpu.PrefetchScalarGridSpec(
            num_scalar_prefetch=0,
            grid=(B, n_hw),
            in_specs=[pl.BlockSpec((1, C, hw_t), lambda b, j: (b, 0, j)),
                      pl.BlockSpec((1, C, 1), lambda b, j: (b, 0, 0))],
            out_specs=pl.BlockSpec((1, C, hw_t), lambda b, j: (b, 0, j)),
        ),
        compiler_params=pltpu.CompilerParams(
            dimension_semantics=("parallel", "parallel"),
            vmem_limit_bytes=vmem_limit,
        ),
        input_output_aliases={0: 0} if donate_x else {},
    )(x, gate)


# --------------------------------------------------------------------------
# Public wrapper.
# --------------------------------------------------------------------------
def channel_attention(x_nchw, w1, b1, w2, b2, *, donate_x=False,
                      max_block_bytes=None):
    """x_nchw: (B, C, H, W); w1: (C/r, C, 1, 1); b1: (C/r,);
    w2: (C, C/r, 1, 1); b2: (C,). Returns (B, C, H, W)."""
    B, C, H, W = x_nchw.shape
    Cr = w1.shape[0]
    HW = H * W

    # Free reshapes only -- no transposes, no extra HBM traffic.
    x = x_nchw.reshape(B, C, HW)
    w1m = w1[:, :, 0, 0].astype(jnp.float32)        # (Cr, C)
    w2m = w2[:, :, 0, 0].astype(jnp.float32)        # (C, Cr)
    b1c = b1.reshape(Cr, 1).astype(jnp.float32)     # (Cr, 1)
    b2c = b2.reshape(C, 1).astype(jnp.float32)      # (C, 1)

    vmem_limit, block_budget = _vmem_budget()
    if max_block_bytes is not None:
        block_budget = max_block_bytes

    elem_bytes = C * HW * x.dtype.itemsize
    if elem_bytes <= block_budget:
        out = _single_pass(x, w1m, b1c, w2m, b2c, block_budget, vmem_limit,
                           donate_x)
    else:
        out = _two_pass(x, w1m, b1c, w2m, b2c, block_budget, vmem_limit,
                        donate_x)
    return out.reshape(B, C, H, W)


def _reference(x, w1, b1, w2, b2):
    # Pure-JAX reference mirroring the PyTorch module (NCHW).
    pooled = jnp.mean(x, axis=(2, 3), keepdims=True)          # (B, C, 1, 1)
    h = jnp.einsum("oc,bcxy->boxy", w1[:, :, 0, 0], pooled) + b1[None, :, None, None]
    h = jnp.maximum(h, 0.0)
    y = jnp.einsum("oc,bcxy->boxy", w2[:, :, 0, 0], h) + b2[None, :, None, None]
    return x * jax.nn.sigmoid(y)


if __name__ == "__main__":
    num_feat = 32
    reduction = 16
    cr = num_feat // reduction

    key = jax.random.PRNGKey(0)
    k_x, k_w1, k_b1, k_w2, k_b2, k_x2, k_x3 = jax.random.split(key, 7)

    # Conv2d 1x1 parameter shapes: (out, in, 1, 1).
    w1 = jax.random.normal(k_w1, (cr, num_feat, 1, 1), jnp.float32) * 0.1
    b1 = jax.random.normal(k_b1, (cr,), jnp.float32) * 0.1
    w2 = jax.random.normal(k_w2, (num_feat, cr, 1, 1), jnp.float32) * 0.1
    b2 = jax.random.normal(k_b2, (num_feat,), jnp.float32) * 0.1

    # (1) Main single-pass path with hardware-derived VMEM/block sizing.
    x = jax.random.normal(k_x, (2, num_feat, 16, 16), jnp.float32)
    out = jax.block_until_ready(channel_attention(x, w1, b1, w2, b2))
    assert out.shape == x.shape
    assert jnp.allclose(out, _reference(x, w1, b1, w2, b2), atol=1e-5, rtol=1e-5)

    # (2) Single-pass with batch packing and a padded tail block (B=3 -> bb=2).
    x3 = jax.random.normal(k_x3, (3, num_feat, 16, 16), jnp.float32)
    out3 = jax.block_until_ready(
        channel_attention(x3, w1, b1, w2, b2, max_block_bytes=80 << 10))
    assert jnp.allclose(out3, _reference(x3, w1, b1, w2, b2), atol=1e-5, rtol=1e-5)

    # (3) Two-pass HW-tiled fallback (one batch element exceeds the block
    #     budget), including a partial spatial tile (HW=400, tile=128).
    x2 = jax.random.normal(k_x2, (2, num_feat, 20, 20), jnp.float32)
    out2 = jax.block_until_ready(
        channel_attention(x2, w1, b1, w2, b2, max_block_bytes=16 << 10))
    assert jnp.allclose(out2, _reference(x2, w1, b1, w2, b2), atol=1e-5, rtol=1e-5)

    print("KERNEL_OK")
</pallas_src>

<mosaic_0001>
module attributes {stable_mosaic.version = 11 : i64} {
  func.func @_channel_attention_kernel(%arg0: i32, %arg1: memref<1x32x256xf32, #tpu.memory_space<vmem>>, %arg2: memref<2x32xf32, #tpu.memory_space<vmem>>, %arg3: memref<2x1xf32, #tpu.memory_space<vmem>>, %arg4: memref<32x2xf32, #tpu.memory_space<vmem>>, %arg5: memref<32x1xf32, #tpu.memory_space<vmem>>, %arg6: memref<1x32x256xf32, #tpu.memory_space<vmem>>, %arg7: memref<32x1xf32, #tpu.memory_space<vmem>>) attributes {dimension_semantics = [#tpu.dimension_semantics<parallel>], iteration_bounds = array<i64: 2>, scalar_prefetch = 0 : i64, scratch_operands = 1 : i64, tpu.core_type = #tpu.core_type<tc>, window_params = [{transform_indices = @transform_0, window_bounds = array<i64: 1, 32, 256>}, {pipeline_mode = #tpu.pipeline_mode<synchronous>, transform_indices = @transform_1, window_bounds = array<i64: 2, 32>}, {pipeline_mode = #tpu.pipeline_mode<synchronous>, transform_indices = @transform_2, window_bounds = array<i64: 2, 1>}, {pipeline_mode = #tpu.pipeline_mode<synchronous>, transform_indices = @transform_3, window_bounds = array<i64: 32, 2>}, {pipeline_mode = #tpu.pipeline_mode<synchronous>, transform_indices = @transform_4, window_bounds = array<i64: 32, 1>}, {transform_indices = @transform_5, window_bounds = array<i64: 1, 32, 256>}]} {
    %cst = arith.constant 1.000000e+00 : f32
    %0 = vector.broadcast %cst : f32 to vector<256x1xf32>
    %c0 = arith.constant 0 : index
    %c0_0 = arith.constant 0 : index
    %c0_1 = arith.constant 0 : index
    %1 = vector.load %arg1[%c0, %c0_0, %c0_1] : memref<1x32x256xf32, #tpu.memory_space<vmem>>, vector<1x32x256xf32>
    %2 = vector.shape_cast %1 : vector<1x32x256xf32> to vector<32x256xf32>
    %cst_2 = arith.constant dense<0.000000e+00> : vector<32x1xf32>
    %3 = tpu.matmul %2, %0, %cst_2 {dimension_numbers = #tpu.dot_dimension_numbers<[1], [0], [0], [1], [0, 0, 1, 1], [], []>} : vector<32x256xf32>, vector<256x1xf32>, vector<32x1xf32> -> vector<32x1xf32>
    %cst_3 = arith.constant 3.906250e-03 : f32
    %4 = vector.broadcast %cst_3 : f32 to vector<32x1xf32>
    %5 = arith.mulf %3, %4 : vector<32x1xf32>
    %c0_4 = arith.constant 0 : index
    %c0_5 = arith.constant 0 : index
    %6 = vector.load %arg7[%c0_4, %c0_5] : memref<32x1xf32, #tpu.memory_space<vmem>>, vector<32x1xf32>
    tpu.vector_store %arg7[%c0_4, %c0_5], %5 {strides = array<i32>} : memref<32x1xf32, #tpu.memory_space<vmem>>, vector<32x1xf32>,
    %c0_6 = arith.constant 0 : index
    %c0_7 = arith.constant 0 : index
    %7 = vector.load %arg7[%c0_6, %c0_7] : memref<32x1xf32, #tpu.memory_space<vmem>>, vector<32x1xf32>
    %c0_8 = arith.constant 0 : index
    %c0_9 = arith.constant 0 : index
    %8 = vector.load %arg2[%c0_8, %c0_9] : memref<2x32xf32, #tpu.memory_space<vmem>>, vector<2x32xf32>
    %cst_10 = arith.constant dense<0.000000e+00> : vector<2x1xf32>
    %9 = tpu.matmul %8, %7, %cst_10 {dimension_numbers = #tpu.dot_dimension_numbers<[1], [0], [0], [1], [0, 0, 1, 1], [], []>} : vector<2x32xf32>, vector<32x1xf32>, vector<2x1xf32> -> vector<2x1xf32>
    %c0_11 = arith.constant 0 : index
    %c0_12 = arith.constant 0 : index
    %10 = vector.load %arg3[%c0_11, %c0_12] : memref<2x1xf32, #tpu.memory_space<vmem>>, vector<2x1xf32>
    %11 = arith.addf %9, %10 : vector<2x1xf32>
    %cst_13 = arith.constant 0.000000e+00 : f32
    %12 = vector.broadcast %cst_13 : f32 to vector<2x1xf32>
    %13 = arith.maximumf %11, %12 : vector<2x1xf32>
    %c0_14 = arith.constant 0 : index
    %c0_15 = arith.constant 0 : index
    %14 = vector.load %arg4[%c0_14, %c0_15] : memref<32x2xf32, #tpu.memory_space<vmem>>, vector<32x2xf32>
    %cst_16 = arith.constant dense<0.000000e+00> : vector<32x1xf32>
    %15 = tpu.matmul %14, %13, %cst_16 {dimension_numbers = #tpu.dot_dimension_numbers<[1], [0], [0], [1], [0, 0, 1, 1], [], []>} : vector<32x2xf32>, vector<2x1xf32>, vector<32x1xf32> -> vector<32x1xf32>
    %c0_17 = arith.constant 0 : index
    %c0_18 = arith.constant 0 : index
    %16 = vector.load %arg5[%c0_17, %c0_18] : memref<32x1xf32, #tpu.memory_space<vmem>>, vector<32x1xf32>
    %17 = arith.addf %15, %16 : vector<32x1xf32>
    %18 = arith.negf %17 : vector<32x1xf32>
    %19 = math.exp %18 : vector<32x1xf32>
    %cst_19 = arith.constant 1.000000e+00 : f32
    %20 = vector.broadcast %cst_19 : f32 to vector<32x1xf32>
    %21 = arith.addf %20, %19 : vector<32x1xf32>
    %22 = arith.divf %20, %21 : vector<32x1xf32>
    %c0_20 = arith.constant 0 : index
    %c0_21 = arith.constant 0 : index
    %c0_22 = arith.constant 0 : index
    %23 = vector.load %arg1[%c0_20, %c0_21, %c0_22] : memref<1x32x256xf32, #tpu.memory_space<vmem>>, vector<1x32x256xf32>
    %24 = vector.shape_cast %23 : vector<1x32x256xf32> to vector<32x256xf32>
    %25 = vector.broadcast %22 : vector<32x1xf32> to vector<32x256xf32>
    %26 = arith.mulf %24, %25 : vector<32x256xf32>
    %c0_23 = arith.constant 0 : index
    %c0_24 = arith.constant 0 : index
    %c0_25 = arith.constant 0 : index
    %27 = vector.load %arg6[%c0_23, %c0_24, %c0_25] : memref<1x32x256xf32, #tpu.memory_space<vmem>>, vector<1x32x256xf32>
    %28 = vector.shape_cast %27 : vector<1x32x256xf32> to vector<32x256xf32>
    %29 = vector.shape_cast %26 : vector<32x256xf32> to vector<1x32x256xf32>
    tpu.vector_store %arg6[%c0_23, %c0_24, %c0_25], %29 {strides = array<i32>} : memref<1x32x256xf32, #tpu.memory_space<vmem>>, vector<1x32x256xf32>,
    return
  }
  func.func @transform_0(%arg0: i32) -> (i32, i32, i32) {
    %c0_i32 = arith.constant 0 : i32
    %c0_i32_0 = arith.constant 0 : i32
    %c0_i32_1 = arith.constant 0 : i32
    return %arg0, %c0_i32, %c0_i32_0 : i32, i32, i32
  }
  func.func @transform_1(%arg0: i32) -> (i32, i32) {
    %c0_i32 = arith.constant 0 : i32
    %c0_i32_0 = arith.constant 0 : i32
    %c0_i32_1 = arith.constant 0 : i32
    return %c0_i32, %c0_i32_0 : i32, i32
  }
  func.func @transform_2(%arg0: i32) -> (i32, i32) {
    %c0_i32 = arith.constant 0 : i32
    %c0_i32_0 = arith.constant 0 : i32
    %c0_i32_1 = arith.constant 0 : i32
    return %c0_i32, %c0_i32_0 : i32, i32
  }
  func.func @transform_3(%arg0: i32) -> (i32, i32) {
    %c0_i32 = arith.constant 0 : i32
    %c0_i32_0 = arith.constant 0 : i32
    %c0_i32_1 = arith.constant 0 : i32
    return %c0_i32, %c0_i32_0 : i32, i32
  }
  func.func @transform_4(%arg0: i32) -> (i32, i32) {
    %c0_i32 = arith.constant 0 : i32
    %c0_i32_0 = arith.constant 0 : i32
    %c0_i32_1 = arith.constant 0 : i32
    return %c0_i32, %c0_i32_0 : i32, i32
  }
  func.func @transform_5(%arg0: i32) -> (i32, i32, i32) {
    %c0_i32 = arith.constant 0 : i32
    %c0_i32_0 = arith.constant 0 : i32
    %c0_i32_1 = arith.constant 0 : i32
    return %arg0, %c0_i32, %c0_i32_0 : i32, i32, i32
  }
}

</mosaic_0001>

<llo_original>
// kernel: tpu_custom_call.1
$region0: #{tpu_custom_call.1}
  #allocation0 [shape = 'u32[]', space=smem, size = 0x4, offset = 0x4, fixed_abs, tag = 'smem constant byte address 0x4 - core index']
  #allocation1 [shape = 'u32[72,128]{1,0:T(1,128)}', space=vmem, size = 0x9000, scoped, tag = 'internal scratch']
  #allocation2 [shape = 'f32[32,1]{1,0:T(8,128)}', space=vmem, size = 0x4000, scoped, tag = 'scratch operand']
  %s0 = inlined_call_operand.hbm [shape: f32[2,32,256], index: 0, kind: input, shape index: {}]
  %s1 = inlined_call_operand.vmem [shape: f32[2,32], index: 1, kind: input, shape index: {}]
  %s2 = inlined_call_operand.vmem [shape: f32[2,1], index: 2, kind: input, shape index: {}]
  %s3 = inlined_call_operand.vmem [shape: f32[32,2], index: 3, kind: input, shape index: {}]
  %s4 = inlined_call_operand.vmem [shape: f32[32,1], index: 4, kind: input, shape index: {}]
  %s5 = inlined_call_operand.hbm [shape: f32[2,32,256], index: 5, kind: output, shape index: {}]
  %s6 = sld [smem:[#allocation0]]
  $region57: #{tpu_custom_call.1} parent=0
    _
  %s8 = ssub.s32 1, %s6
  %s9 = scalar_select 0, %s8, %s6
  $region1: #{tpu_custom_call.1} parent=0
    #allocation3 [shape = 'u8[65536]{0}', space=vmem, size = 0x10000, scoped, tag = 'input window, operand 0']
    #allocation4 [shape = 's32[2]{0}', space=sflag, size = 0x8, scoped, tag = 'scoped memory for tpu_custom_call.1']
    #allocation5 [shape = 's32[2]{0}', space=sflag, size = 0x8, scoped, tag = 'scoped memory for tpu_custom_call.1']
    #allocation6 [shape = 'u8[65536]{0}', space=vmem, size = 0x10000, scoped, tag = 'output window, operand 0']
    %10 = vsyncpa [#allocation4], 0
    %s11 = scalar_lea.sflag [#allocation4], 1
    %12 = vsyncpa %s11, 0
    %13 = vsyncpa [#allocation5], 0
    %s14 = scalar_lea.sflag [#allocation5], 1
    %15 = vsyncpa %s14, 0
    loop: start=0, step=1, limit=4
    $region2: #{tpu_custom_call.1} parent=1 // loop_pre_header
      _
    $region3: #{tpu_custom_call.1} parent=1 // loop_header
      %s17 = sphi 0, %s21
      %p18 = scmp.ge.s32.totalorder %s17, 4
      %s27 = sphi 0, %s29
      %s30 = sphi 0, %s27
      %s31 = sphi 0, %s30
      %s47 = sphi 0, %s31
      %s51 = sphi 0, %s51
      %s53 = sphi 0, %s51
      %s54 = sphi 0, %s53
      %s68 = sphi 0, %s54
      %s72 = sphi 0, %s72
      %s74 = sphi 0, %s72
      %s75 = sphi 0, %s74
      %s89 = sphi 0, %s75
      %s93 = sphi 0, %s93
      %s95 = sphi 0, %s93
      %s96 = sphi 0, %s95
      %s110 = sphi 0, %s96
      %s114 = sphi 0, %s114
      %s116 = sphi 0, %s114
      %s117 = sphi 0, %s116
      %s131 = sphi 0, %s117
      %s137 = sphi 0, %s139
      %s140 = sphi 0, %s137
      %s141 = sphi 0, %s140
      %s157 = sphi 0, %s141
    $region4: #{tpu_custom_call.1} parent=1 // loop_header_branch
      %20 = sbr.rel (%p18) target = $region8
    $region5: #{tpu_custom_call.1} parent=1 // loop_body
      %s22 = ssub.s32 %s17, 1
      %s23 = ssub.s32 %s17, 2
      %s24 = sadd.s32 %s17, 1
      %s25 = ssub.s32 %s17, %s24
      %p26 = scmp.eq.s32.totalorder %s25, 0
      %s28 = sadd.s32 %s27, 1
      %s29 = scalar_select %p26, %s27, %s28
      %p32 = pneg %p26
      %p33 = scmp.eq.s32.totalorder %s17, 1
      %p34 = por %p32, %p33
      %p35 = scmp.ne.s32.totalorder %s27, %s30
      %p36 = scmp.eq.s32.totalorder %s17, 0
      %p37 = por %p35, %p36
      %p38 = scmp.ne.s32.totalorder %s27, %s30
      %p39 = scmp.eq.s32.totalorder %s22, 1
      %p40 = por %p38, %p39
      %p41 = scmp.ne.s32.totalorder %s30, %s31
      %p42 = scmp.eq.s32.totalorder %s22, 0
      %p43 = por %p41, %p42
      %p44 = scmp.ne.s32.totalorder %s30, %s31
      %p45 = scmp.eq.s32.totalorder %s23, 1
      %p46 = por %p44, %p45
      %p48 = scmp.ne.s32.totalorder %s31, %s47
      %p49 = scmp.eq.s32.totalorder %s23, 0
      %p50 = por %p48, %p49
      %s52 = sadd.s32 %s51, 1
      %p55 = scmp.eq.s32.totalorder %s17, 1
      %p56 = scmp.ne.s32.totalorder %s51, %s53
      %p57 = scmp.eq.s32.totalorder %s17, 0
      %p58 = por %p56, %p57
      %p59 = scmp.ne.s32.totalorder %s51, %s53
      %p60 = scmp.eq.s32.totalorder %s22, 1
      %p61 = por %p59, %p60
      %p62 = scmp.ne.s32.totalorder %s53, %s54
      %p63 = scmp.eq.s32.totalorder %s22, 0
      %p64 = por %p62, %p63
      %p65 = scmp.ne.s32.totalorder %s53, %s54
      %p66 = scmp.eq.s32.totalorder %s23, 1
      %p67 = por %p65, %p66
      %p69 = scmp.ne.s32.totalorder %s54, %s68
      %p70 = scmp.eq.s32.totalorder %s23, 0
      %p71 = por %p69, %p70
      %s73 = sadd.s32 %s72, 1
      %p76 = scmp.eq.s32.totalorder %s17, 1
      %p77 = scmp.ne.s32.totalorder %s72, %s74
      %p78 = scmp.eq.s32.totalorder %s17, 0
      %p79 = por %p77, %p78
      %p80 = scmp.ne.s32.totalorder %s72, %s74
      %p81 = scmp.eq.s32.totalorder %s22, 1
      %p82 = por %p80, %p81
      %p83 = scmp.ne.s32.totalorder %s74, %s75
      %p84 = scmp.eq.s32.totalorder %s22, 0
      %p85 = por %p83, %p84
      %p86 = scmp.ne.s32.totalorder %s74, %s75
      %p87 = scmp.eq.s32.totalorder %s23, 1
      %p88 = por %p86, %p87
      %p90 = scmp.ne.s32.totalorder %s75, %s89
      %p91 = scmp.eq.s32.totalorder %s23, 0
      %p92 = por %p90, %p91
      %s94 = sadd.s32 %s93, 1
      %p97 = scmp.eq.s32.totalorder %s17, 1
      %p98 = scmp.ne.s32.totalorder %s93, %s95
      %p99 = scmp.eq.s32.totalorder %s17, 0
      %p100 = por %p98, %p99
      %p101 = scmp.ne.s32.totalorder %s93, %s95
      %p102 = scmp.eq.s32.totalorder %s22, 1
      %p103 = por %p101, %p102
      %p104 = scmp.ne.s32.totalorder %s95, %s96
      %p105 = scmp.eq.s32.totalorder %s22, 0
      %p106 = por %p104, %p105
      %p107 = scmp.ne.s32.totalorder %s95, %s96
      %p108 = scmp.eq.s32.totalorder %s23, 1
      %p109 = por %p107, %p108
      %p111 = scmp.ne.s32.totalorder %s96, %s110
      %p112 = scmp.eq.s32.totalorder %s23, 0
      %p113 = por %p111, %p112
      %s115 = sadd.s32 %s114, 1
      %p118 = scmp.eq.s32.totalorder %s17, 1
      %p119 = scmp.ne.s32.totalorder %s114, %s116
      %p120 = scmp.eq.s32.totalorder %s17, 0
      %p121 = por %p119, %p120
      %p122 = scmp.ne.s32.totalorder %s114, %s116
      %p123 = scmp.eq.s32.totalorder %s22, 1
      %p124 = por %p122, %p123
      %p125 = scmp.ne.s32.totalorder %s116, %s117
      %p126 = scmp.eq.s32.totalorder %s22, 0
      %p127 = por %p125, %p126
      %p128 = scmp.ne.s32.totalorder %s116, %s117
      %p129 = scmp.eq.s32.totalorder %s23, 1
      %p130 = por %p128, %p129
      %p132 = scmp.ne.s32.totalorder %s117, %s131
      %p133 = scmp.eq.s32.totalorder %s23, 0
      %p134 = por %p132, %p133
      %s135 = ssub.s32 %s17, %s24
      %p136 = scmp.eq.s32.totalorder %s135, 0
      %s138 = sadd.s32 %s137, 1
      %s139 = scalar_select %p136, %s137, %s138
      %p142 = pneg %p136
      %p143 = scmp.eq.s32.totalorder %s17, 1
      %p144 = por %p142, %p143
      %p145 = scmp.ne.s32.totalorder %s137, %s140
      %p146 = scmp.eq.s32.totalorder %s17, 0
      %p147 = por %p145, %p146
      %p148 = scmp.ne.s32.totalorder %s137, %s140
      %p149 = scmp.eq.s32.totalorder %s22, 1
      %p150 = por %p148, %p149
      %p151 = scmp.ne.s32.totalorder %s140, %s141
      %p152 = scmp.eq.s32.totalorder %s22, 0
      %p153 = por %p151, %p152
      %p154 = scmp.ne.s32.totalorder %s140, %s141
      %p155 = scmp.eq.s32.totalorder %s23, 1
      %p156 = por %p154, %p155
      %p158 = scmp.ne.s32.totalorder %s141, %s157
      %p159 = scmp.eq.s32.totalorder %s23, 0
      %p160 = por %p158, %p159
      %p161 = scmp.le.s32.totalorder 1, %s17
      %p162 = scmp.lt.s32.totalorder %s17, 3
      %p163 = pnand %p161, %p162
      %p164 = pneg %p163
      // Predicated region
      $region9: #{tpu_custom_call.1} parent=5 // pred_check
        _
      $region10: #{tpu_custom_call.1} parent=5 // pred_check_branch
        %166 = sbr.rel (%p163) target = $region12
      $region11: #{tpu_custom_call.1} parent=5 // pred_region
        %s167 = ssub.s32 %s17, 1
        // Predicated region
        $region13: #{tpu_custom_call.1} parent=11 // pred_check
          %p168 = pneg %p64
        $region14: #{tpu_custom_call.1} parent=11 // pred_check_branch
          %170 = sbr.rel (%p168) target = $region16
        $region15: #{tpu_custom_call.1} parent=11 // pred_region
          _
        $region16: #{tpu_custom_call.1} parent=11 // pred_fallthru
          _
        // Predicated region
        $region17: #{tpu_custom_call.1} parent=11 // pred_check
          %p171 = pneg %p85
        $region18: #{tpu_custom_call.1} parent=11 // pred_check_branch
          %173 = sbr.rel (%p171) target = $region20
        $region19: #{tpu_custom_call.1} parent=11 // pred_region
          _
        $region20: #{tpu_custom_call.1} parent=11 // pred_fallthru
          _
        // Predicated region
        $region21: #{tpu_custom_call.1} parent=11 // pred_check
          %p174 = pneg %p106
        $region22: #{tpu_custom_call.1} parent=11 // pred_check_branch
          %176 = sbr.rel (%p174) target = $region24
        $region23: #{tpu_custom_call.1} parent=11 // pred_region
          _
        $region24: #{tpu_custom_call.1} parent=11 // pred_fallthru
          _
        // Predicated region
        $region25: #{tpu_custom_call.1} parent=11 // pred_check
          %p177 = pneg %p127
        $region26: #{tpu_custom_call.1} parent=11 // pred_check_branch
          %179 = sbr.rel (%p177) target = $region28
        $region27: #{tpu_custom_call.1} parent=11 // pred_region
          _
        $region28: #{tpu_custom_call.1} parent=11 // pred_fallthru
          _
      $region12: #{tpu_custom_call.1} parent=5 // pred_fallthru
        _
      %p180 = scmp.lt.s32.totalorder %s17, 2
      // Predicated region
      $region29: #{tpu_custom_call.1} parent=5 // pred_check
        %p181 = pneg %p180
      $region30: #{tpu_custom_call.1} parent=5 // pred_check_branch
        %183 = sbr.rel (%p181) target = $region32
      $region31: #{tpu_custom_call.1} parent=5 // pred_region
        // Predicated region
        $region33: #{tpu_custom_call.1} parent=31 // pred_check
          %p184 = pneg %p37
        $region34: #{tpu_custom_call.1} parent=31 // pred_check_branch
          %186 = sbr.rel (%p184) target = $region36
        $region35: #{tpu_custom_call.1} parent=31 // pred_region
          %s187 = sand.u32 %s27, 1
          %s188 = scalar_lea.sflag [#allocation4], %s187
          %s189 = sand.u32 %s27, 1
          %s190 = smul.addr %s189, 64
          %s191 = scalar_lea.vmem [#allocation3], %s190
          %193 = vsyncadd %s188, 0
          %s194 = smul.addr %s17, 8
          %s195 = smul.addr %s194, 8
          %s196 = scalar_lea.hbm %s0, %s195
          %s197 = sshll.u32 %s196, 4
          %s198 = int_to_ptr.hbm [resolvable:$true] %s197
          %s199 = sshll.u32 %s191, 4
          %s200 = int_to_ptr.vmem [resolvable:$true] %s199
          %205 = dma.hbm_to_vmem [thread:$0]  %s198, 1024, %s200, %s188, 256, 256, 16
        $region36: #{tpu_custom_call.1} parent=31 // pred_fallthru
          _
      $region32: #{tpu_custom_call.1} parent=5 // pred_fallthru
        _
      %p206 = scmp.le.s32.totalorder 1, %s17
      %p207 = scmp.lt.s32.totalorder %s17, 3
      %p208 = pnand %p206, %p207
      %p209 = pneg %p208
      // Predicated region
      $region37: #{tpu_custom_call.1} parent=5 // pred_check
        _
      $region38: #{tpu_custom_call.1} parent=5 // pred_check_branch
        %211 = sbr.rel (%p208) target = $region40
      $region39: #{tpu_custom_call.1} parent=5 // pred_region
        %s212 = ssub.s32 %s17, 1
        %s213 = sand.u32 %s30, 1
        %s214 = scalar_lea.sflag [#allocation4], %s213
        %s215 = sand.u32 %s30, 1
        %s216 = smul.addr %s215, 64
        %s217 = scalar_lea.vmem [#allocation3], %s216
        // Predicated region
        $region41: #{tpu_custom_call.1} parent=39 // pred_check
          %p218 = pneg %p43
        $region42: #{tpu_custom_call.1} parent=39 // pred_check_branch
          %220 = sbr.rel (%p218) target = $region44
        $region43: #{tpu_custom_call.1} parent=39 // pred_region
          %222 = dma.done %s214, 1024
        $region44: #{tpu_custom_call.1} parent=39 // pred_fallthru
          _
        %s223 = sand.u32 %s30, 1
        %s224 = scalar_lea.sflag [#allocation4], %s223
        %s225 = sand.u32 %s30, 1
        %s226 = smul.addr %s225, 64
        %s227 = scalar_lea.vmem [#allocation3], %s226
        %p228 = pneg %p43
        %p229 = pneg %p40
        %p230 = pneg %p64
        %p231 = pneg %p61
        %p232 = pneg %p85
        %p233 = pneg %p82
        %p234 = pneg %p106
        %p235 = pneg %p103
        %p236 = pneg %p127
        %p237 = pneg %p124
        %p238 = pneg %p153
        %p239 = pneg %p150
        %s240 = sand.u32 %s140, 1
        %s241 = scalar_lea.sflag [#allocation5], %s240
        %s242 = sand.u32 %s140, 1
        %s243 = smul.addr %s242, 64
        %s244 = scalar_lea.vmem [#allocation6], %s243
        %v245 = vld [vmem:[%s217] sm:$0xff]
        %v246 = vld [vmem:[%s217 + $0x8] sm:$0xff]
        %v247 = vld [vmem:[%s217 + $0x10] sm:$0xff]
        %v248 = vld [vmem:[%s217 + $0x18] sm:$0xff]
        %v249 = vld [vmem:[%s217 + $0x20] sm:$0xff]
        %v250 = vld [vmem:[%s217 + $0x28] sm:$0xff]
        %v251 = vld [vmem:[%s217 + $0x30] sm:$0xff]
        %v252 = vld [vmem:[%s217 + $0x38] sm:$0xff]
        %253 = vmatpush.msra.mxu0 1.0
        %254 = vmatpush.msra.mxu0 1.0
        %255 = vmatpush.msra.mxu0 1.0
        %256 = vmatpush.msra.mxu0 1.0
        %257 = vmatpush.msra.mxu0 1.0
        %258 = vmatpush.msra.mxu0 1.0
        %259 = vmatpush.msra.mxu0 1.0
        %260 = vmatpush.msra.mxu0 1.0
        %261 = vmatpush.msra.mxu0 1.0
        %262 = vmatpush.msra.mxu0 1.0
        %263 = vmatpush.msra.mxu0 1.0
        %264 = vmatpush.msra.mxu0 1.0
        %265 = vmatpush.msra.mxu0 1.0
        %266 = vmatpush.msra.mxu0 1.0
        %267 = vmatpush.msra.mxu0 1.0
        %268 = vmatpush.msra.mxu0 1.0
        %269 = vmatmul.f32.gmra.mxu0 %v245
        %v270 = vpop.f32.mrf.mxu0
        %v271 = vadd.f32 0.0, %v270
        %272 = vmatmul.f32.gmra.mxu0 %v247
        %v273 = vpop.f32.mrf.mxu0
        %v274 = vadd.f32 0.0, %v273
        %275 = vmatmul.f32.gmra.mxu0 %v249
        %v276 = vpop.f32.mrf.mxu0
        %v277 = vadd.f32 0.0, %v276
        %278 = vmatmul.f32.gmra.mxu0 %v251
        %v279 = vpop.f32.mrf.mxu0
        %v280 = vadd.f32 0.0, %v279
        %281 = vdwg.mxu0
        %282 = vmatpush.msra.mxu0 1.0
        %283 = vmatpush.msra.mxu0 1.0
        %284 = vmatpush.msra.mxu0 1.0
        %285 = vmatpush.msra.mxu0 1.0
        %286 = vmatpush.msra.mxu0 1.0
        %287 = vmatpush.msra.mxu0 1.0
        %288 = vmatpush.msra.mxu0 1.0
        %289 = vmatpush.msra.mxu0 1.0
        %290 = vmatpush.msra.mxu0 1.0
        %291 = vmatpush.msra.mxu0 1.0
        %292 = vmatpush.msra.mxu0 1.0
        %293 = vmatpush.msra.mxu0 1.0
        %294 = vmatpush.msra.mxu0 1.0
        %295 = vmatpush.msra.mxu0 1.0
        %296 = vmatpush.msra.mxu0 1.0
        %297 = vmatpush.msra.mxu0 1.0
        %298 = vmatmul.f32.gmra.mxu0 %v246
        %v299 = vpop.f32.mrf.mxu0
        %v300 = vadd.f32 %v271, %v299
        %301 = vmatmul.f32.gmra.mxu0 %v248
        %v302 = vpop.f32.mrf.mxu0
        %v303 = vadd.f32 %v274, %v302
        %304 = vmatmul.f32.gmra.mxu0 %v250
        %v305 = vpop.f32.mrf.mxu0
        %v306 = vadd.f32 %v277, %v305
        %307 = vmatmul.f32.gmra.mxu0 %v252
        %v308 = vpop.f32.mrf.mxu0
        %v309 = vadd.f32 %v280, %v308
        %310 = vdwg.mxu0
        %v311 = vmul.f32 %v300, 0.00390625
        %v312 = vmul.f32 %v303, 0.00390625
        %v313 = vmul.f32 %v306, 0.00390625
        %v314 = vmul.f32 %v309, 0.00390625
        %vm315 = vcmask 7168
        %316 = vst.msk [vmem:[#allocation2] sm:$0xff] %vm315, %v311
        %317 = vst.msk [vmem:[#allocation2 + $0x8] sm:$0xff] %vm315, %v312
        %318 = vst.msk [vmem:[#allocation2 + $0x10] sm:$0xff] %vm315, %v313
        %319 = vst.msk [vmem:[#allocation2 + $0x18] sm:$0xff] %vm315, %v314
        %v320 = vld [vmem:[#allocation2] sm:$0xff]
        %v321 = vld [vmem:[#allocation2 + $0x8] sm:$0xff]
        %v322 = vld [vmem:[#allocation2 + $0x10] sm:$0xff]
        %v323 = vld [vmem:[#allocation2 + $0x18] sm:$0xff]
        %v324 = vld [vmem:[%s1] sm:$0x3]
        %v325 = vld [vmem:[%s2] sm:$0x3]
        %vm326 = vcmask 261120
        %v328 = vsel %vm326, %v324, 0
        %330 = vmatpush.msra.mxu0 0.0
        %331 = vmatpush.msra.mxu0 0.0
        %332 = vmatpush.msra.mxu0 0.0
        %333 = vmatpush.msra.mxu0 0.0
        %334 = vmatpush.msra.mxu0 0.0
        %335 = vmatpush.msra.mxu0 0.0
        %336 = vmatpush.msra.mxu0 0.0
        %337 = vmatpush.msra.mxu0 0.0
        %338 = vmatpush.msra.mxu0 0.0
        %339 = vmatpush.msra.mxu0 0.0
        %340 = vmatpush.msra.mxu0 0.0
        %341 = vmatpush.msra.mxu0 0.0
        %342 = vmatpush.msra.mxu0 %v323
        %343 = vmatpush.msra.mxu0 %v322
        %344 = vmatpush.msra.mxu0 %v321
        %345 = vmatpush.msra.mxu0 %v320
        %346 = vmatmul.f32.gmra.mxu0 %v328
        %v347 = vpop.f32.mrf.mxu0
        %v348 = vadd.f32 %v325, %v347
        %349 = vdwg.mxu0
        %v350 = vmax.f32 %v348, 0.0
        %v351 = vld [vmem:[%s3] sm:$0xff]
        %v352 = vld [vmem:[%s3 + $0x8] sm:$0xff]
        %v353 = vld [vmem:[%s3 + $0x10] sm:$0xff]
        %v354 = vld [vmem:[%s3 + $0x18] sm:$0xff]
        %v355 = vld [vmem:[%s4] sm:$0xff]
        %v356 = vld [vmem:[%s4 + $0x8] sm:$0xff]
        %v357 = vld [vmem:[%s4 + $0x10] sm:$0xff]
        %v358 = vld [vmem:[%s4 + $0x18] sm:$0xff]
        %vm359 = vcmask 15360
        %v361 = vsel %vm359, %v351, 0
        %v364 = vsel %vm359, %v352, 0
        %v367 = vsel %vm359, %v353, 0
        %v370 = vsel %vm359, %v354, 0
        %vm372 = vcmask 1041408
        %v374 = vsel %vm372, %v350, 0
        %376 = vmatpush.msra.mxu0 0.0
        %377 = vmatpush.msra.mxu0 0.0
        %378 = vmatpush.msra.mxu0 0.0
        %379 = vmatpush.msra.mxu0 0.0
        %380 = vmatpush.msra.mxu0 0.0
        %381 = vmatpush.msra.mxu0 0.0
        %382 = vmatpush.msra.mxu0 0.0
        %383 = vmatpush.msra.mxu0 0.0
        %384 = vmatpush.msra.mxu0 0.0
        %385 = vmatpush.msra.mxu0 0.0
        %386 = vmatpush.msra.mxu0 0.0
        %387 = vmatpush.msra.mxu0 0.0
        %388 = vmatpush.msra.mxu0 0.0
        %389 = vmatpush.msra.mxu0 0.0
        %390 = vmatpush.msra.mxu0 0.0
        %391 = vmatpush.msra.mxu0 %v374
        %392 = vmatmul.f32.gmra.mxu0 %v361
        %v393 = vpop.f32.mrf.mxu0
        %v394 = vadd.f32 %v355, %v393
        %395 = vmatmul.f32.gmra.mxu0 %v364
        %v396 = vpop.f32.mrf.mxu0
        %v397 = vadd.f32 %v356, %v396
        %398 = vmatmul.f32.gmra.mxu0 %v367
        %v399 = vpop.f32.mrf.mxu0
        %v400 = vadd.f32 %v357, %v399
        %401 = vmatmul.f32.gmra.mxu0 %v370
        %v402 = vpop.f32.mrf.mxu0
        %v403 = vadd.f32 %v358, %v402
        %404 = vdwg.mxu0
        %v405 = vxor.u32 %v394, 2147483648
        %v406 = vxor.u32 %v397, 2147483648
        %v407 = vxor.u32 %v400, 2147483648
        %v408 = vxor.u32 %v403, 2147483648
        %v409 = vmul.f32 %v405, 1.442695
        %v410 = vpow.pop %v409
        %v411 = vmul.f32 %v406, 1.442695
        %v412 = vpow.pop %v411
        %v413 = vmul.f32 %v407, 1.442695
        %v414 = vpow.pop %v413
        %v415 = vmul.f32 %v408, 1.442695
        %v416 = vpow.pop %v415
        %v417 = vadd.f32 %v410, 1.0
        %v418 = vadd.f32 %v412, 1.0
        %v419 = vadd.f32 %v414, 1.0
        %v420 = vadd.f32 %v416, 1.0
        %v421 = vrcp.pop %v417
        %v422 = vmul.f32 %v417, %v421
        %v423 = vsub.f32 1.0, %v422
        %v424 = vmul.f32 %v421, %v423
        %v425 = vadd.f32 %v421, %v424
        %vm426 = vweird.f32 %v417
        %vm427 = vweird.f32 %v421
        %vm428 = vmor %vm426, %vm427
        %v429 = vsel %vm428, %v421, %v425
        %v430 = vand.u32 2147483647, %v417
        %vm431 = vcmp.eq.f32.partialorder %v430, 8.507059e+37
        %v432 = vand.u32 %v417, 2147483648
        %v433 = vor.u32 1.1754944e-38, %v432
        %v434 = vsel %vm431, %v433, %v429
        %v435 = vmul.f32 1.0, %v434
        %v436 = vrcp.pop %v418
        %v437 = vmul.f32 %v418, %v436
        %v438 = vsub.f32 1.0, %v437
        %v439 = vmul.f32 %v436, %v438
        %v440 = vadd.f32 %v436, %v439
        %vm441 = vweird.f32 %v418
        %vm442 = vweird.f32 %v436
        %vm443 = vmor %vm441, %vm442
        %v444 = vsel %vm443, %v436, %v440
        %v445 = vand.u32 2147483647, %v418
        %vm446 = vcmp.eq.f32.partialorder %v445, 8.507059e+37
        %v447 = vand.u32 %v418, 2147483648
        %v448 = vor.u32 1.1754944e-38, %v447
        %v449 = vsel %vm446, %v448, %v444
        %v450 = vmul.f32 1.0, %v449
        %v451 = vrcp.pop %v419
        %v452 = vmul.f32 %v419, %v451
        %v453 = vsub.f32 1.0, %v452
        %v454 = vmul.f32 %v451, %v453
        %v455 = vadd.f32 %v451, %v454
        %vm456 = vweird.f32 %v419
        %vm457 = vweird.f32 %v451
        %vm458 = vmor %vm456, %vm457
        %v459 = vsel %vm458, %v451, %v455
        %v460 = vand.u32 2147483647, %v419
        %vm461 = vcmp.eq.f32.partialorder %v460, 8.507059e+37
        %v462 = vand.u32 %v419, 2147483648
        %v463 = vor.u32 1.1754944e-38, %v462
        %v464 = vsel %vm461, %v463, %v459
        %v465 = vmul.f32 1.0, %v464
        %v466 = vrcp.pop %v420
        %v467 = vmul.f32 %v420, %v466
        %v468 = vsub.f32 1.0, %v467
        %v469 = vmul.f32 %v466, %v468
        %v470 = vadd.f32 %v466, %v469
        %vm471 = vweird.f32 %v420
        %vm472 = vweird.f32 %v466
        %vm473 = vmor %vm471, %vm472
        %v474 = vsel %vm473, %v466, %v470
        %v475 = vand.u32 2147483647, %v420
        %vm476 = vcmp.eq.f32.partialorder %v475, 8.507059e+37
        %v477 = vand.u32 %v420, 2147483648
        %v478 = vor.u32 1.1754944e-38, %v477
        %v479 = vsel %vm476, %v478, %v474
        %v480 = vmul.f32 1.0, %v479
        %v481 = vld [vmem:[%s217] sm:$0xff]
        %v482 = vld [vmem:[%s217 + $0x8] sm:$0xff]
        %v483 = vld [vmem:[%s217 + $0x10] sm:$0xff]
        %v484 = vld [vmem:[%s217 + $0x18] sm:$0xff]
        %v485 = vld [vmem:[%s217 + $0x20] sm:$0xff]
        %v486 = vld [vmem:[%s217 + $0x28] sm:$0xff]
        %v487 = vld [vmem:[%s217 + $0x30] sm:$0xff]
        %v488 = vld [vmem:[%s217 + $0x38] sm:$0xff]
        %490 = vset.pattern.permute.xlu0 0
        %491 = vperm.xlu0 %490, %v435
        %v492 = vpop.permute.xlu0 %491
        %495 = vset.pattern.permute.xlu0 0
        %496 = vperm.xlu0 %495, %v450
        %v497 = vpop.permute.xlu0 %496
        %500 = vset.pattern.permute.xlu0 0
        %501 = vperm.xlu0 %500, %v465
        %v502 = vpop.permute.xlu0 %501
        %505 = vset.pattern.permute.xlu0 0
        %506 = vperm.xlu0 %505, %v480
        %v507 = vpop.permute.xlu0 %506
        %v509 = vmul.f32 %v481, %v492
        %v510 = vmul.f32 %v482, %v492
        %v511 = vmul.f32 %v483, %v497
        %v512 = vmul.f32 %v484, %v497
        %v513 = vmul.f32 %v485, %v502
        %v514 = vmul.f32 %v486, %v502
        %v515 = vmul.f32 %v487, %v507
        %v516 = vmul.f32 %v488, %v507
        %517 = vst [vmem:[%s244] sm:$0xff] %v509
        %518 = vst [vmem:[%s244 + $0x8] sm:$0xff] %v510
        %519 = vst [vmem:[%s244 + $0x10] sm:$0xff] %v511
        %520 = vst [vmem:[%s244 + $0x18] sm:$0xff] %v512
        %521 = vst [vmem:[%s244 + $0x20] sm:$0xff] %v513
        %522 = vst [vmem:[%s244 + $0x28] sm:$0xff] %v514
        %523 = vst [vmem:[%s244 + $0x30] sm:$0xff] %v515
        %524 = vst [vmem:[%s244 + $0x38] sm:$0xff] %v516
        %s525 = sand.u32 %s140, 1
        %s526 = scalar_lea.sflag [#allocation5], %s525
        %s527 = sand.u32 %s140, 1
        %s528 = smul.addr %s527, 64
        %s529 = scalar_lea.vmem [#allocation6], %s528
        // Predicated region
        $region45: #{tpu_custom_call.1} parent=39 // pred_check
          %p530 = pneg %p150
        $region46: #{tpu_custom_call.1} parent=39 // pred_check_branch
          %532 = sbr.rel (%p530) target = $region48
        $region47: #{tpu_custom_call.1} parent=39 // pred_region
          %534 = vsyncadd %s526, 0
          %s535 = smul.addr %s22, 8
          %s536 = smul.addr %s535, 8
          %s537 = scalar_lea.hbm %s5, %s536
          %s538 = sshll.u32 %s529, 4
          %s539 = int_to_ptr.vmem [resolvable:$true] %s538
          %s540 = sshll.u32 %s537, 4
          %s541 = int_to_ptr.hbm [resolvable:$true] %s540
          %546 = dma.vmem_to_hbm [thread:$0]  %s539, 1024, %s541, %s526, 256, 256, 16
        $region48: #{tpu_custom_call.1} parent=39 // pred_fallthru
          _
      $region40: #{tpu_custom_call.1} parent=5 // pred_fallthru
        _
      %p547 = scmp.le.s32.totalorder 2, %s17
      // Predicated region
      $region49: #{tpu_custom_call.1} parent=5 // pred_check
        %p548 = pneg %p547
      $region50: #{tpu_custom_call.1} parent=5 // pred_check_branch
        %550 = sbr.rel (%p548) target = $region52
      $region51: #{tpu_custom_call.1} parent=5 // pred_region
        %s551 = ssub.s32 %s17, 2
        // Predicated region
        $region53: #{tpu_custom_call.1} parent=51 // pred_check
          %p552 = pneg %p156
        $region54: #{tpu_custom_call.1} parent=51 // pred_check_branch
          %554 = sbr.rel (%p552) target = $region56
        $region55: #{tpu_custom_call.1} parent=51 // pred_region
          %s555 = sand.u32 %s141, 1
          %s556 = scalar_lea.sflag [#allocation5], %s555
          %s557 = sand.u32 %s141, 1
          %s558 = smul.addr %s557, 64
          %s559 = scalar_lea.vmem [#allocation6], %s558
          %561 = dma.done %s556, 1024
        $region56: #{tpu_custom_call.1} parent=51 // pred_fallthru
          _
      $region52: #{tpu_custom_call.1} parent=5 // pred_fallthru
        _
    $region6: #{tpu_custom_call.1} parent=1 // loop_footer
      %s21 = sadd.s32 1, %s17
    $region7: #{tpu_custom_call.1} parent=1 // loop_footer_branch
      %16 = sbr.rel target = $region3
    $region8: #{tpu_custom_call.1} parent=1 // loop_exit
      _
    %562 = vsyncpa [#allocation4], 1
    %s563 = scalar_lea.sflag [#allocation4], 1
    %564 = vsyncpa %s563, 1
    %565 = vsyncpa [#allocation5], 1
    %s566 = scalar_lea.sflag [#allocation5], 1
    %567 = vsyncpa %s566, 1

</llo_original>
